<compile_context>
chip_gen: v6e
topology: v6e:2x2x1
jax: 0.10.0
libtpu: 0.0.40
codegen_flags: <defaults>
</compile_context>

<pallas_src>
import functools

import jax
import jax.numpy as jnp
from jax.experimental import pallas as pl
from jax.experimental.pallas import tpu as pltpu


# Per-input, per-block VMEM budget. 2 inputs x 2 pipeline buffers x 2 MiB
# = 8 MiB double-buffered working set -> fits the scoped-VMEM defaults of
# v5e (16 MiB), v6e (32 MiB) and v7x (32 MiB scoped / 64 MiB physical) with
# headroom for accumulators and the tiny output, while being wide enough
# (>= 512 lanes) to sit near the HBM roofline on all three generations.
_BLOCK_BYTES = 2 * 1024 * 1024


def _round_up(a, b):
    return (a + b - 1) // b * b


# ---------------------------------------------------------------------------
# Path A: sigmoid / identity normalization. Inputs viewed as (R, S), R = B*C.
# Grid = (row blocks [parallel], spatial blocks [arbitrary/reduction]).
# ---------------------------------------------------------------------------
def _dice_rows_kernel(x_ref, y_ref, out_ref, int_acc, x2_acc, y2_acc,
                      *, normalization, s_total, ts, needs_mask):
    s = pl.program_id(1)

    @pl.when(s == 0)
    def _():
        int_acc[...] = jnp.zeros_like(int_acc)
        x2_acc[...] = jnp.zeros_like(x2_acc)
        y2_acc[...] = jnp.zeros_like(y2_acc)

    x = x_ref[...].astype(jnp.float32)          # (TR, TS)
    y = y_ref[...].astype(jnp.float32)          # (TR, TS)

    if normalization == "sigmoid":
        x = jax.nn.sigmoid(x)
    # else: identity

    if needs_mask:
        # Zero lanes past the true spatial extent (ragged / padded last tile).
        lane = jax.lax.broadcasted_iota(jnp.int32, x.shape, 1)
        valid = (s * ts + lane) < s_total
        x = jnp.where(valid, x, 0.0)
        y = jnp.where(valid, y, 0.0)

    int_acc[...] += jnp.sum(x * y, axis=-1, keepdims=True)   # (TR, 1)
    x2_acc[...] += jnp.sum(x * x, axis=-1, keepdims=True)
    y2_acc[...] += jnp.sum(y * y, axis=-1, keepdims=True)

    @pl.when(s == pl.num_programs(1) - 1)
    def _():
        numerator = jnp.maximum(2.0 * int_acc[...], 1e-8)
        denominator = jnp.maximum(x2_acc[...] + y2_acc[...], 1e-8)
        out_ref[...] = 1.0 - numerator / denominator          # 1 - dice, (TR,1)


# ---------------------------------------------------------------------------
# Path B: softmax normalization over the channel axis -> channels must be
# resident as a distinct axis. Inputs viewed as (B, C, S), blocks (1, C, TS).
# Grid = (batch blocks [parallel], spatial blocks [arbitrary/reduction]).
# ---------------------------------------------------------------------------
def _dice_softmax_kernel(x_ref, y_ref, out_ref, int_acc, x2_acc, y2_acc,
                         *, s_total, ts, needs_mask):
    s = pl.program_id(1)

    @pl.when(s == 0)
    def _():
        int_acc[...] = jnp.zeros_like(int_acc)
        x2_acc[...] = jnp.zeros_like(x2_acc)
        y2_acc[...] = jnp.zeros_like(y2_acc)

    x = x_ref[...].astype(jnp.float32)          # (TB, C, TS)
    y = y_ref[...].astype(jnp.float32)

    x = jax.nn.softmax(x, axis=1)               # channel axis fully resident

    if needs_mask:
        lane = jax.lax.broadcasted_iota(jnp.int32, x.shape, 2)
        valid = (s * ts + lane) < s_total
        x = jnp.where(valid, x, 0.0)
        y = jnp.where(valid, y, 0.0)

    int_acc[...] += jnp.sum(x * y, axis=-1)     # (TB, C)
    x2_acc[...] += jnp.sum(x * x, axis=-1)
    y2_acc[...] += jnp.sum(y * y, axis=-1)

    @pl.when(s == pl.num_programs(1) - 1)
    def _():
        numerator = jnp.maximum(2.0 * int_acc[...], 1e-8)
        denominator = jnp.maximum(x2_acc[...] + y2_acc[...], 1e-8)
        out_ref[...] = (1.0 - numerator / denominator)[:, None, :]  # (TB,1,C)


def dice_loss(x, y, *, reduction="mean", normalization="sigmoid",
              channel_dim=1):
    """Pallas implementation of flemme DiceLoss.forward.

    x, y: (B, C, *spatial) (or channel at `channel_dim`, transposed to 1)."""
    assert x.shape == y.shape
    if channel_dim != 1:
        # PyTorch applies softmax over channel_dim then transposes; elementwise
        # sigmoid commutes with transpose, so transposing first is equivalent.
        perm = list(range(x.ndim))
        perm[1], perm[channel_dim] = perm[channel_dim], perm[1]
        x = jnp.transpose(x, perm)
        y = jnp.transpose(y, perm)

    B, C = x.shape[0], x.shape[1]
    S = 1
    for d in x.shape[2:]:
        S *= d
    S = max(S, 1)

    itemsize = jnp.dtype(x.dtype).itemsize
    budget_elems = _BLOCK_BYTES // itemsize
    S_pad = _round_up(S, 128)

    if normalization == "softmax":
        x3 = x.reshape(B, C, S)
        y3 = y.reshape(B, C, S)
        TB = 1                                   # batch-sharded (v7x megacore)
        TS = max(128, min(S_pad, (budget_elems // (TB * C)) // 128 * 128))
        n_b = pl.cdiv(B, TB)
        n_s = pl.cdiv(S, TS)
        kernel = functools.partial(_dice_softmax_kernel, s_total=S, ts=TS,
                                   needs_mask=(S % TS) != 0)
        out = pl.pallas_call(
            kernel,
            out_shape=jax.ShapeDtypeStruct((B, 1, C), jnp.float32),
            grid_spec=pltpu.PrefetchScalarGridSpec(
                num_scalar_prefetch=0,
                grid=(n_b, n_s),
                in_specs=[
                    pl.BlockSpec((TB, C, TS), lambda b, s: (b, 0, s)),
                    pl.BlockSpec((TB, C, TS), lambda b, s: (b, 0, s)),
                ],
                out_specs=pl.BlockSpec((TB, 1, C), lambda b, s: (b, 0, 0)),
                scratch_shapes=[pltpu.VMEM((TB, C), jnp.float32)] * 3,
            ),
            compiler_params=pltpu.CompilerParams(
                dimension_semantics=("parallel", "arbitrary")),
        )(x3, y3)
        per_bc = out[:, 0, :]                    # (B, C) of (1 - dice)
    else:
        # sigmoid / identity: flatten (B, C) rows for dense sublane packing.
        R = B * C
        x2 = x.reshape(R, S)
        y2 = y.reshape(R, S)
        if R % 8 == 0:
            # Prefer wide spatial tiles; remaining budget goes to rows.
            TS = max(128, min(S_pad, (budget_elems // 8) // 128 * 128))
            TR = max(8, min(R, (budget_elems // TS) // 8 * 8))
        else:
            # Row count not sublane-aligned: keep full rows (allowed as the
            # full-array-dim exception) and tile only the spatial axis.
            TR = R
            TS = max(128, min(S_pad, max(128, (budget_elems // TR) // 128 * 128)))
        n_r = pl.cdiv(R, TR)
        n_s = pl.cdiv(S, TS)
        kernel = functools.partial(_dice_rows_kernel,
                                   normalization=normalization,
                                   s_total=S, ts=TS,
                                   needs_mask=(S % TS) != 0)
        out = pl.pallas_call(
            kernel,
            out_shape=jax.ShapeDtypeStruct((R, 1), jnp.float32),
            grid_spec=pltpu.PrefetchScalarGridSpec(
                num_scalar_prefetch=0,
                grid=(n_r, n_s),
                in_specs=[
                    pl.BlockSpec((TR, TS), lambda r, s: (r, s)),
                    pl.BlockSpec((TR, TS), lambda r, s: (r, s)),
                ],
                out_specs=pl.BlockSpec((TR, 1), lambda r, s: (r, 0)),
                scratch_shapes=[pltpu.VMEM((TR, 1), jnp.float32)] * 3,
            ),
            compiler_params=pltpu.CompilerParams(
                dimension_semantics=("parallel", "arbitrary")),
        )(x2, y2)
        per_bc = out[:, 0].reshape(B, C)         # (B, C) of (1 - dice)

    loss = jnp.mean(per_bc, axis=1)              # (B,)
    if reduction == "mean":
        return jnp.mean(loss)
    elif reduction == "sum":
        return jnp.sum(loss)
    # PyTorch module returns None for other reductions; we return the
    # unreduced per-batch loss instead (strictly more informative).
    return loss


def _dice_loss_ref(x, y, *, reduction="mean", normalization="sigmoid"):
    # Pure-JAX reference mirroring the PyTorch module.
    if normalization == "sigmoid":
        x = jax.nn.sigmoid(x)
    elif normalization == "softmax":
        x = jax.nn.softmax(x, axis=1)
    B, C = x.shape[0], x.shape[1]
    x = x.reshape(B, C, -1).astype(jnp.float32)
    y = y.reshape(B, C, -1).astype(jnp.float32)
    intersect = (x * y).sum(-1)
    denominator = jnp.clip((x * x).sum(-1) + (y * y).sum(-1), min=1e-8)
    numerator = jnp.clip(2 * intersect, min=1e-8)
    loss = (1 - numerator / denominator).mean(axis=1)
    if reduction == "mean":
        return loss.mean()
    elif reduction == "sum":
        return loss.sum()
    return loss


if __name__ == "__main__":
    key = jax.random.PRNGKey(0)
    kx, ky = jax.random.split(key)

    # Main test: default sigmoid normalization, mean reduction.
    B, C, H, W = 2, 4, 16, 16
    x = jax.random.normal(kx, (B, C, H, W), dtype=jnp.float32)
    y = (jax.random.uniform(ky, (B, C, H, W)) > 0.5).astype(jnp.float32)

    out = dice_loss(x, y, reduction="mean", normalization="sigmoid")
    out = jax.block_until_ready(out)
    ref = _dice_loss_ref(x, y, reduction="mean", normalization="sigmoid")
    assert jnp.allclose(out, ref, atol=1e-5, rtol=1e-5), (out, ref)

    # Secondary test: softmax normalization with a ragged spatial size
    # (15*15 = 225, not a multiple of 128) to exercise the lane mask.
    xr = jax.random.normal(kx, (2, 4, 15, 15), dtype=jnp.float32)
    yr = (jax.random.uniform(ky, (2, 4, 15, 15)) > 0.5).astype(jnp.float32)
    out2 = jax.block_until_ready(
        dice_loss(xr, yr, reduction="sum", normalization="softmax"))
    ref2 = _dice_loss_ref(xr, yr, reduction="sum", normalization="softmax")
    assert jnp.allclose(out2, ref2, atol=1e-5, rtol=1e-5), (out2, ref2)

    print("KERNEL_OK")
</pallas_src>

<mosaic_0001>
module attributes {stable_mosaic.version = 11 : i64} {
  func.func @_dice_rows_kernel(%arg0: i32, %arg1: i32, %arg2: memref<8x256xf32, #tpu.memory_space<vmem>>, %arg3: memref<8x256xf32, #tpu.memory_space<vmem>>, %arg4: memref<8x1xf32, #tpu.memory_space<vmem>>, %arg5: memref<8x1xf32, #tpu.memory_space<vmem>>, %arg6: memref<8x1xf32, #tpu.memory_space<vmem>>, %arg7: memref<8x1xf32, #tpu.memory_space<vmem>>) attributes {dimension_semantics = [#tpu.dimension_semantics<parallel>, #tpu.dimension_semantics<arbitrary>], iteration_bounds = array<i64: 1, 1>, scalar_prefetch = 0 : i64, scratch_operands = 3 : i64, tpu.core_type = #tpu.core_type<tc>, window_params = [{transform_indices = @transform_0, window_bounds = array<i64: 8, 256>}, {transform_indices = @transform_1, window_bounds = array<i64: 8, 256>}, {transform_indices = @transform_2, window_bounds = array<i64: 8, 1>}]} {
    %c0_i32 = arith.constant 0 : i32
    %0 = arith.cmpi eq, %arg1, %c0_i32 : i32
    %1 = arith.extui %0 : i1 to i32
    %c0_i32_0 = arith.constant 0 : i32
    %2 = arith.cmpi ne, %1, %c0_i32_0 : i32
    scf.if %2 {
      %cst_21 = arith.constant 0.000000e+00 : f32
      %31 = vector.broadcast %cst_21 : f32 to vector<8x1xf32>
      %c0_22 = arith.constant 0 : index
      %c0_23 = arith.constant 0 : index
      %32 = vector.load %arg5[%c0_22, %c0_23] : memref<8x1xf32, #tpu.memory_space<vmem>>, vector<8x1xf32>
      tpu.vector_store %arg5[%c0_22, %c0_23], %31 {strides = array<i32>} : memref<8x1xf32, #tpu.memory_space<vmem>>, vector<8x1xf32>,
      %cst_24 = arith.constant 0.000000e+00 : f32
      %33 = vector.broadcast %cst_24 : f32 to vector<8x1xf32>
      %c0_25 = arith.constant 0 : index
      %c0_26 = arith.constant 0 : index
      %34 = vector.load %arg6[%c0_25, %c0_26] : memref<8x1xf32, #tpu.memory_space<vmem>>, vector<8x1xf32>
      tpu.vector_store %arg6[%c0_25, %c0_26], %33 {strides = array<i32>} : memref<8x1xf32, #tpu.memory_space<vmem>>, vector<8x1xf32>,
      %cst_27 = arith.constant 0.000000e+00 : f32
      %35 = vector.broadcast %cst_27 : f32 to vector<8x1xf32>
      %c0_28 = arith.constant 0 : index
      %c0_29 = arith.constant 0 : index
      %36 = vector.load %arg7[%c0_28, %c0_29] : memref<8x1xf32, #tpu.memory_space<vmem>>, vector<8x1xf32>
      tpu.vector_store %arg7[%c0_28, %c0_29], %35 {strides = array<i32>} : memref<8x1xf32, #tpu.memory_space<vmem>>, vector<8x1xf32>,
    } else {
    }
    %c0 = arith.constant 0 : index
    %c0_1 = arith.constant 0 : index
    %3 = vector.load %arg2[%c0, %c0_1] : memref<8x256xf32, #tpu.memory_space<vmem>>, vector<8x256xf32>
    %c0_2 = arith.constant 0 : index
    %c0_3 = arith.constant 0 : index
    %4 = vector.load %arg3[%c0_2, %c0_3] : memref<8x256xf32, #tpu.memory_space<vmem>>, vector<8x256xf32>
    %5 = arith.negf %3 : vector<8x256xf32>
    %6 = math.exp %5 : vector<8x256xf32>
    %cst = arith.constant 1.000000e+00 : f32
    %7 = vector.broadcast %cst : f32 to vector<8x256xf32>
    %8 = arith.addf %7, %6 : vector<8x256xf32>
    %9 = arith.divf %7, %8 : vector<8x256xf32>
    %c0_4 = arith.constant 0 : index
    %c0_5 = arith.constant 0 : index
    %10 = vector.load %arg5[%c0_4, %c0_5] : memref<8x1xf32, #tpu.memory_space<vmem>>, vector<8x1xf32>
    %11 = arith.mulf %9, %4 : vector<8x256xf32>
    %cst_6 = arith.constant dense<0.000000e+00> : vector<8xf32>
    %12 = vector.multi_reduction <add>, %11, %cst_6 [1] : vector<8x256xf32> to vector<8xf32>
    %13 = vector.shape_cast %12 : vector<8xf32> to vector<8x1xf32>
    %14 = arith.addf %10, %13 : vector<8x1xf32>
    %c0_7 = arith.constant 0 : index
    %c0_8 = arith.constant 0 : index
    %15 = vector.load %arg5[%c0_7, %c0_8] : memref<8x1xf32, #tpu.memory_space<vmem>>, vector<8x1xf32>
    tpu.vector_store %arg5[%c0_7, %c0_8], %14 {strides = array<i32>} : memref<8x1xf32, #tpu.memory_space<vmem>>, vector<8x1xf32>,
    %c0_9 = arith.constant 0 : index
    %c0_10 = arith.constant 0 : index
    %16 = vector.load %arg6[%c0_9, %c0_10] : memref<8x1xf32, #tpu.memory_space<vmem>>, vector<8x1xf32>
    %17 = arith.mulf %9, %9 : vector<8x256xf32>
    %cst_11 = arith.constant dense<0.000000e+00> : vector<8xf32>
    %18 = vector.multi_reduction <add>, %17, %cst_11 [1] : vector<8x256xf32> to vector<8xf32>
    %19 = vector.shape_cast %18 : vector<8xf32> to vector<8x1xf32>
    %20 = arith.addf %16, %19 : vector<8x1xf32>
    %c0_12 = arith.constant 0 : index
    %c0_13 = arith.constant 0 : index
    %21 = vector.load %arg6[%c0_12, %c0_13] : memref<8x1xf32, #tpu.memory_space<vmem>>, vector<8x1xf32>
    tpu.vector_store %arg6[%c0_12, %c0_13], %20 {strides = array<i32>} : memref<8x1xf32, #tpu.memory_space<vmem>>, vector<8x1xf32>,
    %c0_14 = arith.constant 0 : index
    %c0_15 = arith.constant 0 : index
    %22 = vector.load %arg7[%c0_14, %c0_15] : memref<8x1xf32, #tpu.memory_space<vmem>>, vector<8x1xf32>
    %23 = arith.mulf %4, %4 : vector<8x256xf32>
    %cst_16 = arith.constant dense<0.000000e+00> : vector<8xf32>
    %24 = vector.multi_reduction <add>, %23, %cst_16 [1] : vector<8x256xf32> to vector<8xf32>
    %25 = vector.shape_cast %24 : vector<8xf32> to vector<8x1xf32>
    %26 = arith.addf %22, %25 : vector<8x1xf32>
    %c0_17 = arith.constant 0 : index
    %c0_18 = arith.constant 0 : index
    %27 = vector.load %arg7[%c0_17, %c0_18] : memref<8x1xf32, #tpu.memory_space<vmem>>, vector<8x1xf32>
    tpu.vector_store %arg7[%c0_17, %c0_18], %26 {strides = array<i32>} : memref<8x1xf32, #tpu.memory_space<vmem>>, vector<8x1xf32>,
    %c0_i32_19 = arith.constant 0 : i32
    %28 = arith.cmpi eq, %arg1, %c0_i32_19 : i32
    %29 = arith.extui %28 : i1 to i32
    %c0_i32_20 = arith.constant 0 : i32
    %30 = arith.cmpi ne, %29, %c0_i32_20 : i32
    scf.if %30 {
      %c0_21 = arith.constant 0 : index
      %c0_22 = arith.constant 0 : index
      %31 = vector.load %arg5[%c0_21, %c0_22] : memref<8x1xf32, #tpu.memory_space<vmem>>, vector<8x1xf32>
      %cst_23 = arith.constant 2.000000e+00 : f32
      %32 = vector.broadcast %cst_23 : f32 to vector<8x1xf32>
      %33 = arith.mulf %32, %31 : vector<8x1xf32>
      %cst_24 = arith.constant 9.99999993E-9 : f32
      %34 = vector.broadcast %cst_24 : f32 to vector<8x1xf32>
      %35 = arith.maximumf %33, %34 : vector<8x1xf32>
      %c0_25 = arith.constant 0 : index
      %c0_26 = arith.constant 0 : index
      %36 = vector.load %arg6[%c0_25, %c0_26] : memref<8x1xf32, #tpu.memory_space<vmem>>, vector<8x1xf32>
      %c0_27 = arith.constant 0 : index
      %c0_28 = arith.constant 0 : index
      %37 = vector.load %arg7[%c0_27, %c0_28] : memref<8x1xf32, #tpu.memory_space<vmem>>, vector<8x1xf32>
      %38 = arith.addf %36, %37 : vector<8x1xf32>
      %cst_29 = arith.constant 9.99999993E-9 : f32
      %39 = vector.broadcast %cst_29 : f32 to vector<8x1xf32>
      %40 = arith.maximumf %38, %39 : vector<8x1xf32>
      %41 = arith.divf %35, %40 : vector<8x1xf32>
      %cst_30 = arith.constant 1.000000e+00 : f32
      %42 = vector.broadcast %cst_30 : f32 to vector<8x1xf32>
      %43 = arith.subf %42, %41 : vector<8x1xf32>
      %c0_31 = arith.constant 0 : index
      %c0_32 = arith.constant 0 : index
      %44 = vector.load %arg4[%c0_31, %c0_32] : memref<8x1xf32, #tpu.memory_space<vmem>>, vector<8x1xf32>
      tpu.vector_store %arg4[%c0_31, %c0_32], %43 {strides = array<i32>} : memref<8x1xf32, #tpu.memory_space<vmem>>, vector<8x1xf32>,
    } else {
    }
    return
  }
  func.func @transform_0(%arg0: i32, %arg1: i32) -> (i32, i32) {
    %c0_i32 = arith.constant 0 : i32
    return %arg0, %arg1 : i32, i32
  }
  func.func @transform_1(%arg0: i32, %arg1: i32) -> (i32, i32) {
    %c0_i32 = arith.constant 0 : i32
    return %arg0, %arg1 : i32, i32
  }
  func.func @transform_2(%arg0: i32, %arg1: i32) -> (i32, i32) {
    %c0_i32 = arith.constant 0 : i32
    %c0_i32_0 = arith.constant 0 : i32
    return %arg0, %c0_i32 : i32, i32
  }
}

</mosaic_0001>

<llo_original>
// kernel: tpu_custom_call.1
$region0: #{tpu_custom_call.1}
  #allocation0 [shape = 'u32[]', space=smem, size = 0x4, offset = 0x4, fixed_abs, tag = 'smem constant byte address 0x4 - core index']
  #allocation1 [shape = 'u32[144,128]{1,0:T(1,128)}', space=vmem, size = 0x12000, scoped, tag = 'internal scratch']
  #allocation2 [shape = 'f32[8,1]{1,0:T(8,128)}', space=vmem, size = 0x1000, scoped, tag = 'scratch operand']
  #allocation3 [shape = 'f32[8,1]{1,0:T(8,128)}', space=vmem, size = 0x1000, scoped, tag = 'scratch operand']
  #allocation4 [shape = 'f32[8,1]{1,0:T(8,128)}', space=vmem, size = 0x1000, scoped, tag = 'scratch operand']
  %s0 = inlined_call_operand.hbm [shape: f32[8,256], index: 0, kind: input, shape index: {}]
  %s1 = inlined_call_operand.hbm [shape: f32[8,256], index: 1, kind: input, shape index: {}]
  %s2 = inlined_call_operand.vmem [shape: f32[8,1], index: 2, kind: output, shape index: {}]
  %s3 = sld [smem:[#allocation0]]
  $region34: #{tpu_custom_call.1} parent=0
    _
  %s5 = ssub.s32 1, %s3
  %s6 = scalar_select 0, %s5, %s3
  $region1: #{tpu_custom_call.1} parent=0
    #allocation5 [shape = 'u8[8192]{0}', space=vmem, size = 0x2000, scoped, tag = 'input window, operand 0, single buffered']
    #allocation6 [shape = 's32[1]{0}', space=sflag, size = 0x4, scoped, tag = 'scoped memory for tpu_custom_call.1']
    #allocation7 [shape = 'u8[8192]{0}', space=vmem, size = 0x2000, scoped, tag = 'input window, operand 1, single buffered']
    #allocation8 [shape = 's32[1]{0}', space=sflag, size = 0x4, scoped, tag = 'scoped memory for tpu_custom_call.1']
    %7 = vsyncpa [#allocation6], 0
    %8 = vsyncpa [#allocation8], 0
    // Predicated region
    $region2: #{tpu_custom_call.1} parent=1 // pred_check
      _
    $region3: #{tpu_custom_call.1} parent=1 // pred_check_branch
      %10 = sbr.rel (0) target = $region5
    $region4: #{tpu_custom_call.1} parent=1 // pred_region
      %s12 = ssub.s32 256, 256
      %13 = vsyncadd [#allocation6], %s12
      %s15 = sshll.u32 [#allocation5], 4
      %s16 = int_to_ptr.vmem [resolvable:$true] %s15
      %18 = dma.hbm_to_vmem [thread:$0]  %s0, 256, %s16, [#allocation6]
    $region5: #{tpu_custom_call.1} parent=1 // pred_fallthru
      _
    // Predicated region
    $region6: #{tpu_custom_call.1} parent=1 // pred_check
      _
    $region7: #{tpu_custom_call.1} parent=1 // pred_check_branch
      %20 = sbr.rel (0) target = $region9
    $region8: #{tpu_custom_call.1} parent=1 // pred_region
      %s22 = ssub.s32 256, 256
      %23 = vsyncadd [#allocation8], %s22
      %s25 = sshll.u32 [#allocation7], 4
      %s26 = int_to_ptr.vmem [resolvable:$true] %s25
      %28 = dma.hbm_to_vmem [thread:$0]  %s1, 256, %s26, [#allocation8]
    $region9: #{tpu_custom_call.1} parent=1 // pred_fallthru
      _
    // Predicated region
    $region10: #{tpu_custom_call.1} parent=1 // pred_check
      _
    $region11: #{tpu_custom_call.1} parent=1 // pred_check_branch
      %30 = sbr.rel (0) target = $region13
    $region12: #{tpu_custom_call.1} parent=1 // pred_region
      %31 = dma.done [#allocation6], 256
    $region13: #{tpu_custom_call.1} parent=1 // pred_fallthru
      _
    // Predicated region
    $region14: #{tpu_custom_call.1} parent=1 // pred_check
      _
    $region15: #{tpu_custom_call.1} parent=1 // pred_check_branch
      %33 = sbr.rel (0) target = $region17
    $region16: #{tpu_custom_call.1} parent=1 // pred_region
      %34 = dma.done [#allocation8], 256
    $region17: #{tpu_custom_call.1} parent=1 // pred_fallthru
      _
    %p35 = scmp.eq.s32.totalorder 0, 0
    // Predicated region
    $region18: #{tpu_custom_call.1} parent=1 // pred_check
      %p36 = pneg %p35
    $region19: #{tpu_custom_call.1} parent=1 // pred_check_branch
      %38 = sbr.rel (%p36) target = $region21
    $region20: #{tpu_custom_call.1} parent=1 // pred_region
      %vm39 = vcmask 7168
      %40 = vst.msk [vmem:[#allocation2] sm:$0xff] %vm39, 0.0
      %41 = vst.msk [vmem:[#allocation3] sm:$0xff] %vm39, 0.0
      %42 = vst.msk [vmem:[#allocation4] sm:$0xff] %vm39, 0.0
    $region21: #{tpu_custom_call.1} parent=1 // pred_fallthru
      _
    %v43 = vld [vmem:[#allocation5] sm:$0xff]
    %v44 = vld [vmem:[#allocation5 + $0x8] sm:$0xff]
    %v45 = vld [vmem:[#allocation7] sm:$0xff]
    %v46 = vld [vmem:[#allocation7 + $0x8] sm:$0xff]
    %v47 = vxor.u32 %v43, 2147483648
    %v48 = vxor.u32 %v44, 2147483648
    %v49 = vmul.f32 %v47, 1.442695
    %v50 = vpow.pop %v49
    %v51 = vmul.f32 %v48, 1.442695
    %v52 = vpow.pop %v51
    %v53 = vadd.f32 %v50, 1.0
    %v54 = vadd.f32 %v52, 1.0
    %v55 = vrcp.pop %v53
    %v56 = vmul.f32 1.0, %v55
    %v57 = vrcp.pop %v54
    %v58 = vmul.f32 1.0, %v57
    %v59 = vld [vmem:[#allocation2] sm:$0xff]
    %v60 = vmul.f32 %v56, %v45
    %v61 = vmul.f32 %v58, %v46
    %v62 = vadd.f32 %v60, %v61
    %63 = vadd.xlane.f32.xlu0 %v62
    %v64 = vpop.xlane.xlu0 %63
    %v65 = vadd.f32 %v59, %v64
    %vm66 = vcmask 7168
    %67 = vst.msk [vmem:[#allocation2] sm:$0xff] %vm66, %v65
    %v68 = vld [vmem:[#allocation3] sm:$0xff]
    %v69 = vmul.f32 %v56, %v56
    %v70 = vmul.f32 %v58, %v58
    %v71 = vadd.f32 %v69, %v70
    %72 = vadd.xlane.f32.xlu0 %v71
    %v73 = vpop.xlane.xlu0 %72
    %v74 = vadd.f32 %v68, %v73
    %75 = vst.msk [vmem:[#allocation3] sm:$0xff] %vm66, %v74
    %v76 = vld [vmem:[#allocation4] sm:$0xff]
    %v77 = vmul.f32 %v45, %v45
    %v78 = vmul.f32 %v46, %v46
    %v79 = vadd.f32 %v77, %v78
    %80 = vadd.xlane.f32.xlu0 %v79
    %v81 = vpop.xlane.xlu0 %80
    %v82 = vadd.f32 %v76, %v81
    %83 = vst.msk [vmem:[#allocation4] sm:$0xff] %vm66, %v82
    // Predicated region
    $region22: #{tpu_custom_call.1} parent=1 // pred_check
      %p84 = pneg %p35
    $region23: #{tpu_custom_call.1} parent=1 // pred_check_branch
      %86 = sbr.rel (%p84) target = $region25
    $region24: #{tpu_custom_call.1} parent=1 // pred_region
      %v87 = vld [vmem:[#allocation2] sm:$0xff]
      %v88 = vmul.f32 %v87, 2.0
      %v89 = vmax.f32 %v88, 1e-08
      %v90 = vld [vmem:[#allocation3] sm:$0xff]
      %v91 = vld [vmem:[#allocation4] sm:$0xff]
      %v92 = vadd.f32 %v90, %v91
      %v93 = vmax.f32 %v92, 1e-08
      %v94 = vrcp.pop %v93
      %v95 = vmul.f32 %v89, %v94
      %v96 = vsub.f32 1.0, %v95
      %97 = vst.msk [vmem:[%s2] sm:$0xff] %vm66, %v96
    $region25: #{tpu_custom_call.1} parent=1 // pred_fallthru
      _
    // Predicated region
    $region26: #{tpu_custom_call.1} parent=1 // pred_check
      _
    $region27: #{tpu_custom_call.1} parent=1 // pred_check_branch
      %99 = sbr.rel (0) target = $region29
    $region28: #{tpu_custom_call.1} parent=1 // pred_region
      _
    $region29: #{tpu_custom_call.1} parent=1 // pred_fallthru
      _
    // Predicated region
    $region30: #{tpu_custom_call.1} parent=1 // pred_check
      _
    $region31: #{tpu_custom_call.1} parent=1 // pred_check_branch
      %101 = sbr.rel (0) target = $region33
    $region32: #{tpu_custom_call.1} parent=1 // pred_region
      _
    $region33: #{tpu_custom_call.1} parent=1 // pred_fallthru
      _
    %102 = vsyncpa [#allocation6], 1
    %103 = vsyncpa [#allocation8], 1

</llo_original>
